<compile_context>
chip_gen: v7x
topology: tpu7x:2x2x1
jax: 0.10.0
libtpu: 0.0.40
codegen_flags: <defaults>
</compile_context>

<pallas_src>
import jax
import jax.numpy as jnp
from jax.experimental import pallas as pl
from jax.experimental.pallas import tpu as pltpu

NUM_CLASSES = 30
PAD_CLASSES = 128          # lane-dense classifier width (unmasked vst)
ALPHA = 1.0
GAMMA = 2.0                # applied as an explicit square (VPU) instead of pow (EUP)


def _custom_head_kernel(x_ref, w1a_ref, w1b_ref, b1_ref, wc_ref, bc_ref, labels_ref,
                        loss_ref, logits_ref):
    B = labels_ref.shape[0]                    # static

    w1a = w1a_ref[...]                         # (H, H)   bf16, first-half rows of W1
    w1b = w1b_ref[...]                         # (H, H)   bf16, second-half rows of W1
    b1 = b1_ref[...]                           # (1, H)   f32

    # Fused W1b pass: rows [B:3B] of x are [os | cls] -> one (2B,H)x(H,H) matmul.
    wb = jnp.dot(x_ref[B:], w1b, preferred_element_type=jnp.float32)   # (2B, H) f32
    os_part = wb[:B]                           # os_emb @ W1b
    cls_part = wb[B:]                          # cls_emb @ W1b

    # fc_layer on concat(ss_emb, os_emb):  concat @ W1 == ss@W1a + os@W1b
    ent = jnp.dot(x_ref[:B], w1a, preferred_element_type=jnp.float32) + os_part + b1
    ent = jnp.maximum(ent, 0.0)                # ReLU  (Dropout == identity in eval)

    # fc_layer (same weights) on concat(ent_emb, cls_emb)
    h = jnp.dot(ent.astype(jnp.bfloat16), w1a, preferred_element_type=jnp.float32) \
        + cls_part + b1
    h = jnp.maximum(h, 0.0)

    # classifier, padded to 128 lanes: pad weight cols are 0, pad bias cols are -1e30
    logits = jnp.dot(h.astype(jnp.bfloat16), wc_ref[...],
                     preferred_element_type=jnp.float32) + bc_ref[...]   # (B, 128) f32
    logits_ref[...] = logits                   # lane-dense, unmasked store

    # FocalLoss(alpha=1, gamma=2, reduction='mean'); pad lanes contribute exp(-1e30)=0.
    m = jnp.max(logits, axis=-1, keepdims=True)
    lse = jnp.log(jnp.sum(jnp.exp(logits - m), axis=-1, keepdims=True)) + m   # (B,1)

    labels = labels_ref[...]                   # (B, 1) int32, always < 30 (< pad lanes)
    class_ids = jax.lax.broadcasted_iota(jnp.int32, logits.shape, 1)          # (B, 128)
    onehot = (class_ids == labels).astype(jnp.float32)
    true_logit = jnp.sum(logits * onehot, axis=-1, keepdims=True)             # (B, 1)

    ce = lse - true_logit                      # per-sample cross entropy
    pt = jnp.exp(-ce)
    one_minus_pt = 1.0 - pt
    f_loss = ALPHA * (one_minus_pt * one_minus_pt) * ce                        # (B, 1)

    # scalar loss over the SMEM path
    loss_ref[0, 0] = jnp.sum(f_loss) * (1.0 / B)


def custom_model_head(pooled_output, ss, os_idx, labels, params):
    """pooled_output: (B, S, H) f32; ss/os_idx/labels: (B,) int32."""
    B, S, H = pooled_output.shape
    idx = jnp.arange(B)
    # glue: gathers pooled_output[:,0], pooled_output[idx, ss], pooled_output[idx, os]
    cls_emb = pooled_output[:, 0, :]
    ss_emb = pooled_output[idx, ss, :]
    os_emb = pooled_output[idx, os_idx, :]
    # Stack into one (3B, H) bf16 slab: a single input DMA instead of three, and the
    # [os | cls] half is contiguous so the shared-W1b matmul fuses into one MXU pass.
    x = jnp.concatenate([ss_emb, os_emb, cls_emb], axis=0).astype(jnp.bfloat16)

    w1a, w1b, b1, wc_pad, bc_pad = params
    labels2d = labels.astype(jnp.int32).reshape(B, 1)

    vmem = pl.BlockSpec(memory_space=pltpu.MemorySpace.VMEM)
    smem = pl.BlockSpec(memory_space=pltpu.MemorySpace.SMEM)
    loss, logits_pad = pl.pallas_call(
        _custom_head_kernel,
        out_shape=(
            jax.ShapeDtypeStruct((1, 1), jnp.float32),              # loss (scalar)
            jax.ShapeDtypeStruct((B, PAD_CLASSES), jnp.float32),    # padded logits
        ),
        in_specs=[vmem] * 7,
        out_specs=(smem, vmem),
    )(x, w1a, w1b, b1, wc_pad, bc_pad, labels2d)
    return loss[0, 0], logits_pad[:, :NUM_CLASSES]


def init_params(key, hidden_size):
    k1, k2, k3, k4 = jax.random.split(key, 4)
    # fc_layer: Linear(2H, H) stored as (2H, H), split into the two H-row halves (bf16)
    w1 = jax.random.normal(k1, (2 * hidden_size, hidden_size), jnp.float32) * 0.05
    w1a = w1[:hidden_size].astype(jnp.bfloat16)
    w1b = w1[hidden_size:].astype(jnp.bfloat16)
    b1 = jax.random.normal(k2, (1, hidden_size), jnp.float32) * 0.01
    # classifier: Linear(H, 30) stored as (H, 30), padded to 128 lane-dense columns.
    wc = jax.random.normal(k3, (hidden_size, NUM_CLASSES), jnp.float32) * 0.05
    bc = jax.random.normal(k4, (1, NUM_CLASSES), jnp.float32) * 0.01
    wc_pad = jnp.zeros((hidden_size, PAD_CLASSES), jnp.float32)
    wc_pad = wc_pad.at[:, :NUM_CLASSES].set(wc).astype(jnp.bfloat16)
    bc_pad = jnp.full((1, PAD_CLASSES), -1e30, jnp.float32)   # pad lanes -> exp()==0
    bc_pad = bc_pad.at[:, :NUM_CLASSES].set(bc)
    return (w1a, w1b, b1, wc_pad, bc_pad)


if __name__ == "__main__":
    B, S, H = 8, 16, 32
    key = jax.random.PRNGKey(0)
    k_pool, k_ss, k_os, k_lab, k_par = jax.random.split(key, 5)

    pooled_output = jax.random.normal(k_pool, (B, S, H), jnp.float32)
    ss = jax.random.randint(k_ss, (B,), 1, S, dtype=jnp.int32)
    os_idx = jax.random.randint(k_os, (B,), 1, S, dtype=jnp.int32)
    labels = jax.random.randint(k_lab, (B,), 0, NUM_CLASSES, dtype=jnp.int32)
    params = init_params(k_par, H)

    loss, logits = custom_model_head(pooled_output, ss, os_idx, labels, params)
    jax.block_until_ready((loss, logits))
    assert logits.shape == (B, NUM_CLASSES)
    assert loss.shape == ()
    print("KERNEL_OK")
</pallas_src>

<mosaic_0001>
module attributes {stable_mosaic.version = 11 : i64} {
  func.func @_custom_head_kernel(%arg0: memref<24x32xbf16, #tpu.memory_space<vmem>>, %arg1: memref<32x32xbf16, #tpu.memory_space<vmem>>, %arg2: memref<32x32xbf16, #tpu.memory_space<vmem>>, %arg3: memref<1x32xf32, #tpu.memory_space<vmem>>, %arg4: memref<32x128xbf16, #tpu.memory_space<vmem>>, %arg5: memref<1x128xf32, #tpu.memory_space<vmem>>, %arg6: memref<8x1xi32, #tpu.memory_space<vmem>>, %arg7: memref<1x1xf32, #tpu.memory_space<smem>>, %arg8: memref<8x128xf32, #tpu.memory_space<vmem>>) attributes {dimension_semantics = [], scalar_prefetch = 0 : i64, scratch_operands = 0 : i64, tpu.core_type = #tpu.core_type<tc>} {
    %c0 = arith.constant 0 : index
    %c0_0 = arith.constant 0 : index
    %0 = vector.load %arg1[%c0, %c0_0] : memref<32x32xbf16, #tpu.memory_space<vmem>>, vector<32x32xbf16>
    %c0_1 = arith.constant 0 : index
    %c0_2 = arith.constant 0 : index
    %1 = vector.load %arg2[%c0_1, %c0_2] : memref<32x32xbf16, #tpu.memory_space<vmem>>, vector<32x32xbf16>
    %c0_3 = arith.constant 0 : index
    %c0_4 = arith.constant 0 : index
    %2 = vector.load %arg3[%c0_3, %c0_4] : memref<1x32xf32, #tpu.memory_space<vmem>>, vector<1x32xf32>
    %c8 = arith.constant 8 : index
    %c0_5 = arith.constant 0 : index
    %3 = vector.load %arg0[%c8, %c0_5] : memref<24x32xbf16, #tpu.memory_space<vmem>>, vector<16x32xbf16>
    %cst = arith.constant dense<0.000000e+00> : vector<16x32xf32>
    %4 = tpu.matmul %3, %1, %cst {dimension_numbers = #tpu.dot_dimension_numbers<[1], [0], [0], [1], [0, 0, 1, 1], [], []>} : vector<16x32xbf16>, vector<32x32xbf16>, vector<16x32xf32> -> vector<16x32xf32>
    %5 = vector.extract_strided_slice %4 {offsets = [0, 0], sizes = [8, 32], strides = [1, 1]} : vector<16x32xf32> to vector<8x32xf32>
    %6 = vector.extract_strided_slice %4 {offsets = [8, 0], sizes = [8, 32], strides = [1, 1]} : vector<16x32xf32> to vector<8x32xf32>
    %c0_6 = arith.constant 0 : index
    %c0_7 = arith.constant 0 : index
    %7 = vector.load %arg0[%c0_6, %c0_7] : memref<24x32xbf16, #tpu.memory_space<vmem>>, vector<8x32xbf16>
    %cst_8 = arith.constant dense<0.000000e+00> : vector<8x32xf32>
    %8 = tpu.matmul %7, %0, %cst_8 {dimension_numbers = #tpu.dot_dimension_numbers<[1], [0], [0], [1], [0, 0, 1, 1], [], []>} : vector<8x32xbf16>, vector<32x32xbf16>, vector<8x32xf32> -> vector<8x32xf32>
    %9 = arith.addf %8, %5 : vector<8x32xf32>
    %10 = vector.broadcast %2 : vector<1x32xf32> to vector<8x32xf32>
    %11 = arith.addf %9, %10 : vector<8x32xf32>
    %cst_9 = arith.constant 0.000000e+00 : f32
    %12 = vector.broadcast %cst_9 : f32 to vector<8x32xf32>
    %13 = arith.maximumf %11, %12 : vector<8x32xf32>
    %14 = arith.truncf %13 : vector<8x32xf32> to vector<8x32xbf16>
    %cst_10 = arith.constant dense<0.000000e+00> : vector<8x32xf32>
    %15 = tpu.matmul %14, %0, %cst_10 {dimension_numbers = #tpu.dot_dimension_numbers<[1], [0], [0], [1], [0, 0, 1, 1], [], []>} : vector<8x32xbf16>, vector<32x32xbf16>, vector<8x32xf32> -> vector<8x32xf32>
    %16 = arith.addf %15, %6 : vector<8x32xf32>
    %17 = vector.broadcast %2 : vector<1x32xf32> to vector<8x32xf32>
    %18 = arith.addf %16, %17 : vector<8x32xf32>
    %cst_11 = arith.constant 0.000000e+00 : f32
    %19 = vector.broadcast %cst_11 : f32 to vector<8x32xf32>
    %20 = arith.maximumf %18, %19 : vector<8x32xf32>
    %21 = arith.truncf %20 : vector<8x32xf32> to vector<8x32xbf16>
    %c0_12 = arith.constant 0 : index
    %c0_13 = arith.constant 0 : index
    %22 = vector.load %arg4[%c0_12, %c0_13] : memref<32x128xbf16, #tpu.memory_space<vmem>>, vector<32x128xbf16>
    %cst_14 = arith.constant dense<0.000000e+00> : vector<8x128xf32>
    %23 = tpu.matmul %21, %22, %cst_14 {dimension_numbers = #tpu.dot_dimension_numbers<[1], [0], [0], [1], [0, 0, 1, 1], [], []>} : vector<8x32xbf16>, vector<32x128xbf16>, vector<8x128xf32> -> vector<8x128xf32>
    %c0_15 = arith.constant 0 : index
    %c0_16 = arith.constant 0 : index
    %24 = vector.load %arg5[%c0_15, %c0_16] : memref<1x128xf32, #tpu.memory_space<vmem>>, vector<1x128xf32>
    %25 = vector.broadcast %24 : vector<1x128xf32> to vector<8x128xf32>
    %26 = arith.addf %23, %25 : vector<8x128xf32>
    %c0_17 = arith.constant 0 : index
    %c0_18 = arith.constant 0 : index
    %27 = vector.load %arg8[%c0_17, %c0_18] : memref<8x128xf32, #tpu.memory_space<vmem>>, vector<8x128xf32>
    tpu.vector_store %arg8[%c0_17, %c0_18], %26 {strides = array<i32>} : memref<8x128xf32, #tpu.memory_space<vmem>>, vector<8x128xf32>,
    %cst_19 = arith.constant dense<0xFF800000> : vector<8xf32>
    %28 = vector.multi_reduction <maximumf>, %26, %cst_19 [1] : vector<8x128xf32> to vector<8xf32>
    %29 = vector.shape_cast %28 : vector<8xf32> to vector<8x1xf32>
    %30 = vector.broadcast %29 : vector<8x1xf32> to vector<8x128xf32>
    %31 = arith.subf %26, %30 : vector<8x128xf32>
    %32 = math.exp %31 : vector<8x128xf32>
    %cst_20 = arith.constant dense<0.000000e+00> : vector<8xf32>
    %33 = vector.multi_reduction <add>, %32, %cst_20 [1] : vector<8x128xf32> to vector<8xf32>
    %34 = vector.shape_cast %33 : vector<8xf32> to vector<8x1xf32>
    %35 = math.log %34 : vector<8x1xf32>
    %36 = arith.addf %35, %29 : vector<8x1xf32>
    %c0_21 = arith.constant 0 : index
    %c0_22 = arith.constant 0 : index
    %37 = vector.load %arg6[%c0_21, %c0_22] : memref<8x1xi32, #tpu.memory_space<vmem>>, vector<8x1xi32>
    %38 = tpu.iota {dimensions = array<i32: 1>} : vector<8x128xi32>
    %39 = vector.broadcast %37 : vector<8x1xi32> to vector<8x128xi32>
    %40 = arith.cmpi eq, %38, %39 : vector<8x128xi32>
    %41 = arith.extui %40 : vector<8x128xi1> to vector<8x128xi32>
    %42 = arith.sitofp %41 : vector<8x128xi32> to vector<8x128xf32>
    %43 = arith.mulf %26, %42 : vector<8x128xf32>
    %cst_23 = arith.constant dense<0.000000e+00> : vector<8xf32>
    %44 = vector.multi_reduction <add>, %43, %cst_23 [1] : vector<8x128xf32> to vector<8xf32>
    %45 = vector.shape_cast %44 : vector<8xf32> to vector<8x1xf32>
    %46 = arith.subf %36, %45 : vector<8x1xf32>
    %cst_24 = arith.constant 0.000000e+00 : f32
    %47 = vector.broadcast %cst_24 : f32 to vector<8x1xf32>
    %48 = arith.subf %47, %46 : vector<8x1xf32>
    %49 = math.exp %48 : vector<8x1xf32>
    %cst_25 = arith.constant 1.000000e+00 : f32
    %50 = vector.broadcast %cst_25 : f32 to vector<8x1xf32>
    %51 = arith.subf %50, %49 : vector<8x1xf32>
    %52 = arith.mulf %51, %51 : vector<8x1xf32>
    %cst_26 = arith.constant 1.000000e+00 : f32
    %53 = vector.broadcast %cst_26 : f32 to vector<8x1xf32>
    %54 = arith.mulf %53, %52 : vector<8x1xf32>
    %55 = arith.mulf %54, %46 : vector<8x1xf32>
    %56 = vector.shape_cast %55 : vector<8x1xf32> to vector<1x8x1xf32>
    %cst_27 = arith.constant dense<0.000000e+00> : vector<1xf32>
    %57 = vector.multi_reduction <add>, %56, %cst_27 [1, 2] : vector<1x8x1xf32> to vector<1xf32>
    %58 = vector.shape_cast %57 : vector<1xf32> to vector<1x1x1xf32>
    %59 = vector.extract %58[0, 0, 0] : f32 from vector<1x1x1xf32>
    %cst_28 = arith.constant 1.250000e-01 : f32
    %60 = arith.mulf %59, %cst_28 : f32
    %c0_29 = arith.constant 0 : index
    %c0_30 = arith.constant 0 : index
    %61 = memref.load %arg7[%c0_29, %c0_30] : memref<1x1xf32, #tpu.memory_space<smem>>
    memref.store %60, %arg7[%c0_29, %c0_30] : memref<1x1xf32, #tpu.memory_space<smem>>
    return
  }
}

</mosaic_0001>

<llo_original>
// kernel: tpu_custom_call.1
$region0: #{tpu_custom_call.1}
  #allocation0 [shape = 'u32[]', space=smem, size = 0x4, offset = 0x4, fixed_abs, tag = 'smem constant byte address 0x4 - core index']
  #allocation1 [shape = 'u32[144,128]{1,0:T(1,128)}', space=vmem, size = 0x12000, scoped, tag = 'internal scratch']
  %s0 = inlined_call_operand.hbm [shape: bf16[24,32], index: 0, kind: input, shape index: {}]
  %s1 = inlined_call_operand.hbm [shape: bf16[32,32], index: 1, kind: input, shape index: {}]
  %s2 = inlined_call_operand.vmem [shape: bf16[32,32], index: 2, kind: input, shape index: {}]
  %s3 = inlined_call_operand.vmem [shape: f32[1,32], index: 3, kind: input, shape index: {}]
  %s4 = inlined_call_operand.hbm [shape: bf16[32,128], index: 4, kind: input, shape index: {}]
  %s5 = inlined_call_operand.vmem [shape: f32[1,128], index: 5, kind: input, shape index: {}]
  %s6 = inlined_call_operand.vmem [shape: s32[8,1], index: 6, kind: input, shape index: {}]
  %s7 = inlined_call_operand.hbm [shape: f32[1,1], index: 7, kind: output, shape index: {0}]
  %s8 = inlined_call_operand.hbm [shape: f32[8,128], index: 8, kind: output, shape index: {1}]
  %9 = xla_tuple %s7, %s8
  %s10 = sld [smem:[#allocation0]]
  $region58: #{tpu_custom_call.1} parent=0
    _
  %s12 = ssub.s32 1, %s10
  %s13 = scalar_select 0, %s12, %s10
  $region1: #{tpu_custom_call.1} parent=0
    #allocation2 [shape = 'u8[6144]{0}', space=vmem, size = 0x1800, scoped, tag = 'input window, operand 0, single buffered']
    #allocation3 [shape = 's32[1]{0}', space=sflag, size = 0x4, scoped, tag = 'scoped memory for tpu_custom_call.1']
    #allocation4 [shape = 's32[1]{0}', space=sflag, size = 0x4, scoped, tag = 'scoped memory for tpu_custom_call.1']
    #allocation5 [shape = 's32[1]{0}', space=sflag, size = 0x4, scoped, tag = 'scoped memory for tpu_custom_call.1']
    #allocation6 [shape = 'u8[8192]{0}', space=vmem, size = 0x2000, scoped, tag = 'input window, operand 1, single buffered']
    #allocation7 [shape = 's32[1]{0}', space=sflag, size = 0x4, scoped, tag = 'scoped memory for tpu_custom_call.1']
    #allocation8 [shape = 'u8[8192]{0}', space=vmem, size = 0x2000, scoped, tag = 'input window, operand 4, single buffered']
    #allocation9 [shape = 'u8[512]{0}', space=smem, size = 0x200, scoped, tag = 'output window, operand 0, single buffered']
    #allocation10 [shape = 'u8[4096]{0}', space=vmem, size = 0x1000, scoped, tag = 'output window, operand 1, single buffered']
    %14 = vsyncpa [#allocation3], 0
    %15 = vsyncpa [#allocation7], 0
    %16 = vsyncpa [#allocation5], 0
    %17 = vsyncpa [#allocation4], 0
    // Predicated region
    $region2: #{tpu_custom_call.1} parent=1 // pred_check
      _
    $region3: #{tpu_custom_call.1} parent=1 // pred_check_branch
      %19 = sbr.rel (0) target = $region5
    $region4: #{tpu_custom_call.1} parent=1 // pred_region
      %s21 = ssub.s32 192, 192
      %22 = vsyncadd [#allocation3], %s21
      %s23 = sshll.u32 [#allocation2], 4
      %s24 = int_to_ptr.vmem [resolvable:$true] %s23
      %29 = dma.hbm_to_vmem [thread:$0]  %s0, 192, %s24, [#allocation3], 64, 64, 4
    $region5: #{tpu_custom_call.1} parent=1 // pred_fallthru
      _
    // Predicated region
    $region6: #{tpu_custom_call.1} parent=1 // pred_check
      _
    $region7: #{tpu_custom_call.1} parent=1 // pred_check_branch
      %31 = sbr.rel (0) target = $region9
    $region8: #{tpu_custom_call.1} parent=1 // pred_region
      %s33 = ssub.s32 256, 256
      %34 = vsyncadd [#allocation7], %s33
      %s35 = sshll.u32 [#allocation6], 4
      %s36 = int_to_ptr.vmem [resolvable:$true] %s35
      %41 = dma.hbm_to_vmem [thread:$0]  %s1, 256, %s36, [#allocation7], 64, 64, 4
    $region9: #{tpu_custom_call.1} parent=1 // pred_fallthru
      _
    // Predicated region
    $region10: #{tpu_custom_call.1} parent=1 // pred_check
      _
    $region11: #{tpu_custom_call.1} parent=1 // pred_check_branch
      %43 = sbr.rel (0) target = $region13
    $region12: #{tpu_custom_call.1} parent=1 // pred_region
      _
    $region13: #{tpu_custom_call.1} parent=1 // pred_fallthru
      _
    // Predicated region
    $region14: #{tpu_custom_call.1} parent=1 // pred_check
      _
    $region15: #{tpu_custom_call.1} parent=1 // pred_check_branch
      %45 = sbr.rel (0) target = $region17
    $region16: #{tpu_custom_call.1} parent=1 // pred_region
      _
    $region17: #{tpu_custom_call.1} parent=1 // pred_fallthru
      _
    // Predicated region
    $region18: #{tpu_custom_call.1} parent=1 // pred_check
      _
    $region19: #{tpu_custom_call.1} parent=1 // pred_check_branch
      %47 = sbr.rel (0) target = $region21
    $region20: #{tpu_custom_call.1} parent=1 // pred_region
      %s49 = ssub.s32 256, 256
      %50 = vsyncadd [#allocation7], %s49
      %s51 = sshll.u32 [#allocation8], 4
      %s52 = int_to_ptr.vmem [resolvable:$true] %s51
      %57 = dma.hbm_to_vmem [thread:$0]  %s4, 256, %s52, [#allocation7], 64, 64, 4
    $region21: #{tpu_custom_call.1} parent=1 // pred_fallthru
      _
    // Predicated region
    $region22: #{tpu_custom_call.1} parent=1 // pred_check
      _
    $region23: #{tpu_custom_call.1} parent=1 // pred_check_branch
      %59 = sbr.rel (0) target = $region25
    $region24: #{tpu_custom_call.1} parent=1 // pred_region
      _
    $region25: #{tpu_custom_call.1} parent=1 // pred_fallthru
      _
    // Predicated region
    $region26: #{tpu_custom_call.1} parent=1 // pred_check
      _
    $region27: #{tpu_custom_call.1} parent=1 // pred_check_branch
      %61 = sbr.rel (0) target = $region29
    $region28: #{tpu_custom_call.1} parent=1 // pred_region
      _
    $region29: #{tpu_custom_call.1} parent=1 // pred_fallthru
      _
    // Predicated region
    $region30: #{tpu_custom_call.1} parent=1 // pred_check
      _
    $region31: #{tpu_custom_call.1} parent=1 // pred_check_branch
      %63 = sbr.rel (0) target = $region33
    $region32: #{tpu_custom_call.1} parent=1 // pred_region
      %64 = dma.done [#allocation3], 192
    $region33: #{tpu_custom_call.1} parent=1 // pred_fallthru
      _
    // Predicated region
    $region34: #{tpu_custom_call.1} parent=1 // pred_check
      _
    $region35: #{tpu_custom_call.1} parent=1 // pred_check_branch
      %66 = sbr.rel (0) target = $region37
    $region36: #{tpu_custom_call.1} parent=1 // pred_region
      %67 = dma.done [#allocation7], 256
    $region37: #{tpu_custom_call.1} parent=1 // pred_fallthru
      _
    // Predicated region
    $region38: #{tpu_custom_call.1} parent=1 // pred_check
      _
    $region39: #{tpu_custom_call.1} parent=1 // pred_check_branch
      %69 = sbr.rel (0) target = $region41
    $region40: #{tpu_custom_call.1} parent=1 // pred_region
      %70 = dma.done [#allocation7], 256
    $region41: #{tpu_custom_call.1} parent=1 // pred_fallthru
      _
    %v72 = vld [vmem:[#allocation6] sm:$0xf]
    %v73 = vld [vmem:[#allocation6 + $0x4] sm:$0xf]
    %v74 = vld [vmem:[#allocation6 + $0x8] sm:$0xf]
    %v75 = vld [vmem:[#allocation6 + $0xc] sm:$0xf]
    %v76 = vld [vmem:[%s2] sm:$0xf]
    %v77 = vld [vmem:[%s2 + $0x4] sm:$0xf]
    %v78 = vld [vmem:[%s2 + $0x8] sm:$0xf]
    %v79 = vld [vmem:[%s2 + $0xc] sm:$0xf]
    %v80 = vld [vmem:[%s3] sm:$0x1]
    %v81 = vld [vmem:[#allocation2 + $0x4] sm:$0xf]
    %v82 = vld [vmem:[#allocation2 + $0x8] sm:$0xf]
    %v85 = vunpack.c.l.b16 %v81
    %v86 = vunpack.c.l.b16 %v82
    %v87 = vpack.c.b16 %v86, %v85
    %v92 = vunpack.c.l.b16 %v76
    %v93 = vunpack.c.l.b16 %v77
    %v94 = vunpack.c.l.b16 %v78
    %v95 = vunpack.c.l.b16 %v79
    %v96 = vpack.c.b16 %v93, %v92
    %v97 = vpack.c.b16 %v95, %v94
    %vm100 = vcmask 261120
    %v102 = vsel %vm100, %v87, 0
    %104 = vmatprep.subr.bf16.mxu0 0
    %105 = vmatpush1.bf16.msra.mxu0 %v96
    %106 = vmatprep.subr.bf16.mxu0 0
    %107 = vmatpush1.bf16.msra.mxu0 %v97
    %108 = vmatprep.subr.bf16.mxu0 0
    %109 = vmatpush1.bf16.msra.mxu0 0
    %110 = vmatprep.subr.bf16.mxu0 0
    %111 = vmatpush1.bf16.msra.mxu0 0
    %112 = vmatprep.subr.bf16.mxu0 0
    %113 = vmatpush1.bf16.msra.mxu0 0
    %114 = vmatprep.subr.bf16.mxu0 0
    %115 = vmatpush1.bf16.msra.mxu0 0
    %116 = vmatprep.subr.bf16.mxu0 0
    %117 = vmatpush1.bf16.msra.mxu0 0
    %118 = vmatprep.subr.bf16.mxu0 0
    %119 = vmatpush1.bf16.msra.mxu0 0
    %120 = vmatprep.subr.bf16.mxu0 0
    %121 = vmatpush1.bf16.msra.mxu0 0
    %122 = vmatprep.subr.bf16.mxu0 0
    %123 = vmatpush1.bf16.msra.mxu0 0
    %124 = vmatprep.subr.bf16.mxu0 0
    %125 = vmatpush1.bf16.msra.mxu0 0
    %126 = vmatprep.subr.bf16.mxu0 0
    %127 = vmatpush1.bf16.msra.mxu0 0
    %128 = vmatprep.subr.bf16.mxu0 0
    %129 = vmatpush1.bf16.msra.mxu0 0
    %130 = vmatprep.subr.bf16.mxu0 0
    %131 = vmatpush1.bf16.msra.mxu0 0
    %132 = vmatprep.subr.bf16.mxu0 0
    %133 = vmatpush1.bf16.msra.mxu0 0
    %134 = vmatprep.subr.bf16.mxu0 0
    %135 = vmatpush1.bf16.msra.mxu0 0
    %136 = vmatprep.mubr.bf16.mxu0 0
    %137 = vmatmul.mubr.bf16.gmra.mrb[0].mxu0 %v102
    %v138 = vpop.f32.mrb[0].mxu0
    %v139 = vadd.f32 0.0, %v138
    %v140 = vpop.f32.mrb[0].mxu0
    %v141 = vpop.f32.mrb[0].mxu0
    %v142 = vadd.f32 0.0, %v141
    %v143 = vpop.f32.mrb[0].mxu0
    %144 = vdwg.mxu0
    %v145 = vld [vmem:[#allocation2] sm:$0xf]
    %v150 = vunpack.c.l.b16 %v72
    %v151 = vunpack.c.l.b16 %v73
    %v152 = vunpack.c.l.b16 %v74
    %v153 = vunpack.c.l.b16 %v75
    %v154 = vpack.c.b16 %v151, %v150
    %v155 = vpack.c.b16 %v153, %v152
    %v159 = vsel %vm100, %v145, 0
    %161 = vmatprep.subr.bf16.mxu0 0
    %162 = vmatpush1.bf16.msra.mxu0 %v154
    %163 = vmatprep.subr.bf16.mxu0 0
    %164 = vmatpush1.bf16.msra.mxu0 %v155
    %165 = vmatprep.subr.bf16.mxu0 0
    %166 = vmatpush1.bf16.msra.mxu0 0
    %167 = vmatprep.subr.bf16.mxu0 0
    %168 = vmatpush1.bf16.msra.mxu0 0
    %169 = vmatprep.subr.bf16.mxu0 0
    %170 = vmatpush1.bf16.msra.mxu0 0
    %171 = vmatprep.subr.bf16.mxu0 0
    %172 = vmatpush1.bf16.msra.mxu0 0
    %173 = vmatprep.subr.bf16.mxu0 0
    %174 = vmatpush1.bf16.msra.mxu0 0
    %175 = vmatprep.subr.bf16.mxu0 0
    %176 = vmatpush1.bf16.msra.mxu0 0
    %177 = vmatprep.subr.bf16.mxu0 0
    %178 = vmatpush1.bf16.msra.mxu0 0
    %179 = vmatprep.subr.bf16.mxu0 0
    %180 = vmatpush1.bf16.msra.mxu0 0
    %181 = vmatprep.subr.bf16.mxu0 0
    %182 = vmatpush1.bf16.msra.mxu0 0
    %183 = vmatprep.subr.bf16.mxu0 0
    %184 = vmatpush1.bf16.msra.mxu0 0
    %185 = vmatprep.subr.bf16.mxu0 0
    %186 = vmatpush1.bf16.msra.mxu0 0
    %187 = vmatprep.subr.bf16.mxu0 0
    %188 = vmatpush1.bf16.msra.mxu0 0
    %189 = vmatprep.subr.bf16.mxu0 0
    %190 = vmatpush1.bf16.msra.mxu0 0
    %191 = vmatprep.subr.bf16.mxu0 0
    %192 = vmatpush1.bf16.msra.mxu0 0
    %193 = vmatprep.mubr.bf16.mxu0 0
    %194 = vmatmul.mubr.bf16.gmra.mrb[0].mxu0 %v159
    %v195 = vpop.f32.mrb[0].mxu0
    %v196 = vadd.f32 %v139, %v195
    %v197 = vpop.f32.mrb[0].mxu0
    %v198 = vpop.f32.mrb[0].mxu0
    %v199 = vpop.f32.mrb[0].mxu0
    %200 = vdwg.mxu0
    %v202 = vlaneseq
    %v203 = vshrl.u32 %v202, 7
    %v204 = vsub.s32 0, %v203
    %v205 = vrot.slane %v80, %v204
    %v207 = vadd.f32 %v196, %v205
    %v208 = vmax.f32 %v207, 0.0
    %v209 = vpack.c.bf16 %v208, %v208
    %v211 = vsel %vm100, %v209, 0
    %213 = vmatprep.subr.bf16.mxu0 0
    %214 = vmatpush1.bf16.msra.mxu0 %v154
    %215 = vmatprep.subr.bf16.mxu0 0
    %216 = vmatpush1.bf16.msra.mxu0 %v155
    %217 = vmatprep.subr.bf16.mxu0 0
    %218 = vmatpush1.bf16.msra.mxu0 0
    %219 = vmatprep.subr.bf16.mxu0 0
    %220 = vmatpush1.bf16.msra.mxu0 0
    %221 = vmatprep.subr.bf16.mxu0 0
    %222 = vmatpush1.bf16.msra.mxu0 0
    %223 = vmatprep.subr.bf16.mxu0 0
    %224 = vmatpush1.bf16.msra.mxu0 0
    %225 = vmatprep.subr.bf16.mxu0 0
    %226 = vmatpush1.bf16.msra.mxu0 0
    %227 = vmatprep.subr.bf16.mxu0 0
    %228 = vmatpush1.bf16.msra.mxu0 0
    %229 = vmatprep.subr.bf16.mxu0 0
    %230 = vmatpush1.bf16.msra.mxu0 0
    %231 = vmatprep.subr.bf16.mxu0 0
    %232 = vmatpush1.bf16.msra.mxu0 0
    %233 = vmatprep.subr.bf16.mxu0 0
    %234 = vmatpush1.bf16.msra.mxu0 0
    %235 = vmatprep.subr.bf16.mxu0 0
    %236 = vmatpush1.bf16.msra.mxu0 0
    %237 = vmatprep.subr.bf16.mxu0 0
    %238 = vmatpush1.bf16.msra.mxu0 0
    %239 = vmatprep.subr.bf16.mxu0 0
    %240 = vmatpush1.bf16.msra.mxu0 0
    %241 = vmatprep.subr.bf16.mxu0 0
    %242 = vmatpush1.bf16.msra.mxu0 0
    %243 = vmatprep.subr.bf16.mxu0 0
    %244 = vmatpush1.bf16.msra.mxu0 0
    %245 = vmatprep.mubr.bf16.mxu0 0
    %246 = vmatmul.mubr.bf16.gmra.mrb[0].mxu0 %v211
    %v247 = vpop.f32.mrb[0].mxu0
    %v248 = vadd.f32 %v142, %v247
    %v249 = vpop.f32.mrb[0].mxu0
    %v250 = vpop.f32.mrb[0].mxu0
    %v251 = vpop.f32.mrb[0].mxu0
    %252 = vdwg.mxu0
    %v253 = vadd.f32 %v248, %v205
    %v254 = vmax.f32 %v253, 0.0
    %v255 = vpack.c.bf16 %v254, %v254
    %v256 = vld [vmem:[#allocation8] sm:$0xf]
    %v257 = vld [vmem:[#allocation8 + $0x4] sm:$0xf]
    %v258 = vld [vmem:[#allocation8 + $0x8] sm:$0xf]
    %v259 = vld [vmem:[#allocation8 + $0xc] sm:$0xf]
    %v260 = vld [vmem:[%s5] sm:$0x1]
    %v262 = vlaneseq
    %v263 = vshrl.u32 %v262, 7
    %v264 = vsub.s32 0, %v263
    %v265 = vrot.slane %v260, %v264
    %v271 = vunpack.c.l.b16 %v256
    %v272 = vunpack.c.l.b16 %v257
    %v273 = vunpack.c.l.b16 %v258
    %v274 = vunpack.c.l.b16 %v259
    %v275 = vpack.c.b16 %v272, %v271
    %v276 = vpack.c.b16 %v274, %v273
    %v280 = vsel %vm100, %v255, 0
    %282 = vmatprep.subr.bf16.mxu0 0
    %283 = vmatpush1.bf16.msra.mxu0 %v275
    %284 = vmatprep.subr.bf16.mxu0 0
    %285 = vmatpush1.bf16.msra.mxu0 %v276
    %286 = vmatprep.subr.bf16.mxu0 0
    %287 = vmatpush1.bf16.msra.mxu0 0
    %288 = vmatprep.subr.bf16.mxu0 0
    %289 = vmatpush1.bf16.msra.mxu0 0
    %290 = vmatprep.subr.bf16.mxu0 0
    %291 = vmatpush1.bf16.msra.mxu0 0
    %292 = vmatprep.subr.bf16.mxu0 0
    %293 = vmatpush1.bf16.msra.mxu0 0
    %294 = vmatprep.subr.bf16.mxu0 0
    %295 = vmatpush1.bf16.msra.mxu0 0
    %296 = vmatprep.subr.bf16.mxu0 0
    %297 = vmatpush1.bf16.msra.mxu0 0
    %298 = vmatprep.subr.bf16.mxu0 0
    %299 = vmatpush1.bf16.msra.mxu0 0
    %300 = vmatprep.subr.bf16.mxu0 0
    %301 = vmatpush1.bf16.msra.mxu0 0
    %302 = vmatprep.subr.bf16.mxu0 0
    %303 = vmatpush1.bf16.msra.mxu0 0
    %304 = vmatprep.subr.bf16.mxu0 0
    %305 = vmatpush1.bf16.msra.mxu0 0
    %306 = vmatprep.subr.bf16.mxu0 0
    %307 = vmatpush1.bf16.msra.mxu0 0
    %308 = vmatprep.subr.bf16.mxu0 0
    %309 = vmatpush1.bf16.msra.mxu0 0
    %310 = vmatprep.subr.bf16.mxu0 0
    %311 = vmatpush1.bf16.msra.mxu0 0
    %312 = vmatprep.subr.bf16.mxu0 0
    %313 = vmatpush1.bf16.msra.mxu0 0
    %314 = vmatprep.mubr.bf16.mxu0 0
    %315 = vmatmul.mubr.bf16.gmra.mrb[0].mxu0 %v280
    %v316 = vpop.f32.mrb[0].mxu0
    %v317 = vadd.f32 %v265, %v316
    %v318 = vpop.f32.mrb[0].mxu0
    %v319 = vpop.f32.mrb[0].mxu0
    %v320 = vpop.f32.mrb[0].mxu0
    %321 = vdwg.mxu0
    %322 = vst [vmem:[#allocation10] sm:$0xff] %v317
    %323 = vmax.xlane.f32.xlu0 %v317
    %v324 = vpop.xlane.xlu0 %323
    %v325 = vsub.f32 %v317, %v324
    %v326 = vmul.f32 %v325, 1.442695
    %v327 = vpow.pop %v326
    %328 = vadd.xlane.f32.xlu0 %v327
    %v329 = vpop.xlane.xlu0 %328
    %v330 = vlog2.pop %v329
    %v331 = vmul.f32 %v330, 0.6931472
    %v332 = vadd.f32 %v331, %v324
    %v333 = vld [vmem:[%s6] sm:$0xff]
    %v334 = vlaneseq
    %v335 = vand.u32 %v334, 127
    %336 = vset.pattern.permute.xlu0 0
    %337 = vperm.xlu0 %336, %v333
    %v338 = vpop.permute.xlu0 %337
    %vm339 = vcmp.eq.s32.totalorder %v335, %v338
    %v340 = vsel %vm339, 1, 0
    %v341 = vcvt.s32.f32 %v340
    %v342 = vmul.f32 %v317, %v341
    %343 = vadd.xlane.f32.xlu0 %v342
    %v344 = vpop.xlane.xlu0 %343
    %v345 = vsub.f32 %v332, %v344
    %v346 = vsub.f32 0.0, %v345
    %v347 = vmul.f32 %v346, 1.442695
    %v348 = vpow.pop %v347
    %v349 = vsub.f32 1.0, %v348
    %v350 = vmul.f32 %v349, %v349
    %v351 = vmul.f32 %v350, %v345
    %vm352 = vcmask 7168
    %v353 = vsel %vm352, %v351, 0.0
    %354 = vadd.xlane.f32.xlu0 %v353
    %v355 = vpop.xlane.xlu0 %354
    %v356 = vrot.slane %v355, 4
    %v357 = vadd.f32 %v355, %v356
    %v358 = vrot.slane %v357, 2
    %v359 = vadd.f32 %v357, %v358
    %v360 = vrot.slane %v359, 1
    %v361 = vadd.f32 %v359, %v360
    %s362 = vtos %v361
    %s363 = smul.f32 %s362, 0.125
    %s364 = scalar_lea.smem [#allocation9], 0
    %365 = sst [smem:[%s364]] %s363
    // Predicated region
    $region42: #{tpu_custom_call.1} parent=1 // pred_check
      _
    $region43: #{tpu_custom_call.1} parent=1 // pred_check_branch
      %367 = sbr.rel (0) target = $region45
    $region44: #{tpu_custom_call.1} parent=1 // pred_region
      %s369 = ssub.s32 16, 16
      %370 = vsyncadd [#allocation5], %s369
      %373 = dma.smem_to_hbm [#allocation9], 16, %s7, [#allocation5]
    $region45: #{tpu_custom_call.1} parent=1 // pred_fallthru
      _
    // Predicated region
    $region46: #{tpu_custom_call.1} parent=1 // pred_check
      _
    $region47: #{tpu_custom_call.1} parent=1 // pred_check_branch
      %375 = sbr.rel (0) target = $region49
    $region48: #{tpu_custom_call.1} parent=1 // pred_region
      %s377 = ssub.s32 128, 128
      %378 = vsyncadd [#allocation4], %s377
      %s380 = sshll.u32 [#allocation10], 4
      %s381 = int_to_ptr.vmem [resolvable:$true] %s380
      %383 = dma.vmem_to_hbm [thread:$0]  %s381, 128, %s8, [#allocation4]
    $region49: #{tpu_custom_call.1} parent=1 // pred_fallthru
      _
    // Predicated region
    $region50: #{tpu_custom_call.1} parent=1 // pred_check
      _
    $region51: #{tpu_custom_call.1} parent=1 // pred_check_branch
      %385 = sbr.rel (0) target = $region53
    $region52: #{tpu_custom_call.1} parent=1 // pred_region
      %386 = dma.done [#allocation5], 16
    $region53: #{tpu_custom_call.1} parent=1 // pred_fallthru
      _
    // Predicated region
    $region54: #{tpu_custom_call.1} parent=1 // pred_check
      _
    $region55: #{tpu_custom_call.1} parent=1 // pred_check_branch
      %388 = sbr.rel (0) target = $region57
    $region56: #{tpu_custom_call.1} parent=1 // pred_region
      %389 = dma.done [#allocation4], 128
    $region57: #{tpu_custom_call.1} parent=1 // pred_fallthru
      _
    %390 = sfence
    %391 = vsyncpa [#allocation3], 1
    %392 = vsyncpa [#allocation7], 1
    %393 = vsyncpa [#allocation4], 1
    %394 = vsyncpa [#allocation5], 1

</llo_original>
